<compile_context>
chip_gen: v7x
topology: tpu7x:2x2x1
jax: 0.10.0
libtpu: 0.0.40
codegen_flags: <defaults>
</compile_context>

<pallas_src>
import jax
import jax.numpy as jnp
from jax.experimental import pallas as pl
from jax.experimental.pallas import tpu as pltpu


def _round_up(x, m):
    return ((x + m - 1) // m) * m


def _weighted_bow_kernel(emb_ref, len_ref, pos_ref, out_ref):
    """emb (TB, T, E), lengths (TB, 1) int32, pos_mask (T, E) -> out (TB, E)."""
    emb = emb_ref[...]                                          # (TB, T, E) input dtype
    pos = pos_ref[...]                                          # (T, E)
    lens = len_ref[...]                                         # (TB, 1) int32
    tb, t, _ = emb.shape

    # Per-row validity mask from sentence lengths: (TB, T)
    t_idx = jax.lax.broadcasted_iota(jnp.int32, (tb, t), 1)
    valid = (t_idx < lens).astype(emb.dtype)

    # Positional-mask weighting + length masking in input dtype; f32 accumulation in the reduce.
    w = emb * pos[None, :, :] * valid[:, :, None]               # (TB, T, E)
    out_ref[...] = jnp.sum(w, axis=1, dtype=jnp.float32).astype(out_ref.dtype)


def _chip_config():
    """(vmem_limit_bytes, min_grid_steps) chosen per TPU generation."""
    vmem_cap = None
    try:
        info = pltpu.get_tpu_info()
        vmem_cap = getattr(info, "vmem_capacity_bytes", None)
    except Exception:
        vmem_cap = None
    if not vmem_cap:
        vmem_cap = 64 * 1024 * 1024                 # conservative fallback (v7x-sized VMEM)
    small_vmem = vmem_cap <= 64 * 1024 * 1024       # v7x: 64 MiB/TC, 2 TCs per chip
    vmem_limit = (36 if small_vmem else 64) * 1024 * 1024
    min_grid_steps = 4 if small_vmem else 1         # keep both v7x cores pipelined; no clamp on 1-TC chips
    return vmem_limit, min_grid_steps


def entnet_sentence_encoder(input_ids, lengths, embed_table, pos_mask, *, block_b=None):
    """input_ids (B, T) int, lengths (B,) int, embed_table (V, E), pos_mask (T, E) -> (B, E)."""
    B, T = input_ids.shape
    V, E = embed_table.shape
    assert pos_mask.shape == (T, E)
    assert lengths.shape == (B,)

    # TODO(synk): data-dependent embedding gather over an arbitrary-size vocab has no clean dense
    # Pallas equivalent (would need per-row DMA gather); done with XLA here.
    emb = jnp.take(embed_table, input_ids, axis=0)              # (B, T, E)
    lengths2d = lengths.astype(jnp.int32).reshape(B, 1)

    vmem_limit, min_steps = _chip_config()

    if block_b is None:
        itemsize = jnp.dtype(emb.dtype).itemsize
        sub = {4: 8, 2: 16, 1: 32}.get(itemsize, 8)             # min sublane tile per dtype
        # Padded VMEM footprint per batch row of the (TB, T, E) tile (lane/sublane padding!).
        padded_row = _round_up(T, sub) * _round_up(E, 128) * itemsize
        padded_row_f32 = _round_up(T, 8) * _round_up(E, 128) * 4
        per_row = 2 * padded_row + 2 * padded_row_f32           # 2x double-buffer + ~2 f32 temps
        budget = vmem_limit // 2                                # headroom: pos_mask, out, lengths, spills
        tb = max(1, budget // per_row)
        if min_steps > 1:
            tb = min(tb, max(1, pl.cdiv(B, min_steps)))
        if tb >= B:
            block_b = B                                         # full extent: no (8,128) issue
        else:
            block_b = max(8, (tb // 8) * 8)                     # keep second-minor dims 8-aligned
            if block_b >= B:
                block_b = B
    block_b = int(block_b)

    grid = (pl.cdiv(B, block_b),)

    return pl.pallas_call(
        _weighted_bow_kernel,
        out_shape=jax.ShapeDtypeStruct((B, E), embed_table.dtype),
        grid=grid,
        in_specs=[
            pl.BlockSpec((block_b, T, E), lambda b: (b, 0, 0)),   # gathered embeddings
            pl.BlockSpec((block_b, 1), lambda b: (b, 0)),         # lengths (per-row scalars)
            pl.BlockSpec((T, E), lambda b: (0, 0)),               # positional mask (resident)
        ],
        out_specs=pl.BlockSpec((block_b, E), lambda b: (b, 0)),   # single output stream
        compiler_params=pltpu.CompilerParams(
            dimension_semantics=("parallel",),
            vmem_limit_bytes=int(vmem_limit),
        ),
    )(emb, lengths2d, pos_mask)


def _reference(input_ids, lengths, embed_table, pos_mask):
    emb = embed_table[input_ids].astype(jnp.float32)            # (B, T, E)
    T = input_ids.shape[1]
    valid = (jnp.arange(T)[None, :] < lengths[:, None]).astype(jnp.float32)
    out = jnp.sum(emb * pos_mask.astype(jnp.float32)[None] * valid[:, :, None], axis=1)
    return out.astype(embed_table.dtype)


def _check(B, T, E, V, seed):
    key = jax.random.PRNGKey(seed)
    k1, k2, k3, k4 = jax.random.split(key, 4)
    input_ids = jax.random.randint(k1, (B, T), 0, V, dtype=jnp.int32)
    lengths = jax.random.randint(k2, (B,), 1, T + 1, dtype=jnp.int32)
    embed_table = jax.random.normal(k3, (V, E), dtype=jnp.float32)
    pos_mask = jax.random.normal(k4, (T, E), dtype=jnp.float32)

    out = entnet_sentence_encoder(input_ids, lengths, embed_table, pos_mask)
    out = jax.block_until_ready(out)

    ref = _reference(input_ids, lengths, embed_table, pos_mask)
    assert out.shape == (B, E)
    assert jnp.allclose(out, ref, atol=1e-5, rtol=1e-5)


if __name__ == "__main__":
    # Small shapes consistent with the module: batch, sentence length, embedding/hidden size, vocab.
    _check(B=2, T=8, E=32, V=50, seed=0)     # block_b == B, grid=(1,)
    _check(B=32, T=8, E=32, V=50, seed=0)    # exercises batch tiling (>=4 steps on v7x)
    print("KERNEL_OK")
</pallas_src>

<mosaic_0001>
module attributes {stable_mosaic.version = 11 : i64} {
  func.func @_weighted_bow_kernel(%arg0: i32, %arg1: memref<2x8x32xf32, #tpu.memory_space<vmem>>, %arg2: memref<2x1xi32, #tpu.memory_space<vmem>>, %arg3: memref<8x32xf32, #tpu.memory_space<vmem>>, %arg4: memref<2x32xf32, #tpu.memory_space<vmem>>) attributes {dimension_semantics = [#tpu.dimension_semantics<parallel>], iteration_bounds = array<i64: 1>, scalar_prefetch = 0 : i64, scratch_operands = 0 : i64, tpu.core_type = #tpu.core_type<tc>, window_params = [{transform_indices = @transform_0, window_bounds = array<i64: 2, 8, 32>}, {transform_indices = @transform_1, window_bounds = array<i64: 2, 1>}, {pipeline_mode = #tpu.pipeline_mode<synchronous>, transform_indices = @transform_2, window_bounds = array<i64: 8, 32>}, {transform_indices = @transform_3, window_bounds = array<i64: 2, 32>}]} {
    %c0 = arith.constant 0 : index
    %c0_0 = arith.constant 0 : index
    %c0_1 = arith.constant 0 : index
    %0 = vector.load %arg1[%c0, %c0_0, %c0_1] : memref<2x8x32xf32, #tpu.memory_space<vmem>>, vector<2x8x32xf32>
    %c0_2 = arith.constant 0 : index
    %c0_3 = arith.constant 0 : index
    %1 = vector.load %arg3[%c0_2, %c0_3] : memref<8x32xf32, #tpu.memory_space<vmem>>, vector<8x32xf32>
    %c0_4 = arith.constant 0 : index
    %c0_5 = arith.constant 0 : index
    %2 = vector.load %arg2[%c0_4, %c0_5] : memref<2x1xi32, #tpu.memory_space<vmem>>, vector<2x1xi32>
    %3 = tpu.iota {dimensions = array<i32: 1>} : vector<2x8xi32>
    %4 = vector.broadcast %2 : vector<2x1xi32> to vector<2x8xi32>
    %5 = arith.cmpi slt, %3, %4 : vector<2x8xi32>
    %6 = arith.extui %5 : vector<2x8xi1> to vector<2x8xi32>
    %7 = arith.sitofp %6 : vector<2x8xi32> to vector<2x8xf32>
    %8 = vector.shape_cast %1 : vector<8x32xf32> to vector<1x8x32xf32>
    %9 = vector.broadcast %8 : vector<1x8x32xf32> to vector<2x8x32xf32>
    %10 = arith.mulf %0, %9 : vector<2x8x32xf32>
    %11 = vector.shape_cast %7 : vector<2x8xf32> to vector<2x8x1xf32>
    %12 = vector.broadcast %11 : vector<2x8x1xf32> to vector<2x8x32xf32>
    %13 = arith.mulf %10, %12 : vector<2x8x32xf32>
    %cst = arith.constant dense<0.000000e+00> : vector<2x32xf32>
    %14 = vector.multi_reduction <add>, %13, %cst [1] : vector<2x8x32xf32> to vector<2x32xf32>
    %c0_6 = arith.constant 0 : index
    %c0_7 = arith.constant 0 : index
    %15 = vector.load %arg4[%c0_6, %c0_7] : memref<2x32xf32, #tpu.memory_space<vmem>>, vector<2x32xf32>
    tpu.vector_store %arg4[%c0_6, %c0_7], %14 {strides = array<i32>} : memref<2x32xf32, #tpu.memory_space<vmem>>, vector<2x32xf32>,
    return
  }
  func.func @transform_0(%arg0: i32) -> (i32, i32, i32) {
    %c0_i32 = arith.constant 0 : i32
    %c0_i32_0 = arith.constant 0 : i32
    %c0_i32_1 = arith.constant 0 : i32
    return %arg0, %c0_i32, %c0_i32_0 : i32, i32, i32
  }
  func.func @transform_1(%arg0: i32) -> (i32, i32) {
    %c0_i32 = arith.constant 0 : i32
    %c0_i32_0 = arith.constant 0 : i32
    return %arg0, %c0_i32 : i32, i32
  }
  func.func @transform_2(%arg0: i32) -> (i32, i32) {
    %c0_i32 = arith.constant 0 : i32
    %c0_i32_0 = arith.constant 0 : i32
    %c0_i32_1 = arith.constant 0 : i32
    return %c0_i32, %c0_i32_0 : i32, i32
  }
  func.func @transform_3(%arg0: i32) -> (i32, i32) {
    %c0_i32 = arith.constant 0 : i32
    %c0_i32_0 = arith.constant 0 : i32
    return %arg0, %c0_i32 : i32, i32
  }
}

</mosaic_0001>

<llo_original>
// kernel: tpu_custom_call.1
$region0: #{tpu_custom_call.1}
  #allocation0 [shape = 'u32[]', space=smem, size = 0x4, offset = 0x4, fixed_abs, tag = 'smem constant byte address 0x4 - core index']
  #allocation1 [shape = 'u32[144,128]{1,0:T(1,128)}', space=vmem, size = 0x12000, scoped, tag = 'internal scratch']
  %s0 = inlined_call_operand.hbm [shape: f32[2,8,32], index: 0, kind: input, shape index: {}]
  %s1 = inlined_call_operand.vmem [shape: s32[2,1], index: 1, kind: input, shape index: {}]
  %s2 = inlined_call_operand.vmem [shape: f32[8,32], index: 2, kind: input, shape index: {}]
  %s3 = inlined_call_operand.hbm [shape: f32[2,32], index: 3, kind: output, shape index: {}]
  %s4 = sld [smem:[#allocation0]]
  $region26: #{tpu_custom_call.1} parent=0
    _
  %s6 = ssub.s32 1, %s4
  %s7 = scalar_select 0, %s6, %s4
  $region1: #{tpu_custom_call.1} parent=0
    #allocation2 [shape = 'u8[8192]{0}', space=vmem, size = 0x2000, scoped, tag = 'input window, operand 0, single buffered']
    #allocation3 [shape = 's32[1]{0}', space=sflag, size = 0x4, scoped, tag = 'scoped memory for tpu_custom_call.1']
    #allocation4 [shape = 's32[1]{0}', space=sflag, size = 0x4, scoped, tag = 'scoped memory for tpu_custom_call.1']
    #allocation5 [shape = 'u8[1024]{0}', space=vmem, size = 0x400, scoped, tag = 'output window, operand 0, single buffered']
    %8 = vsyncpa [#allocation3], 0
    %9 = vsyncpa [#allocation4], 0
    // Predicated region
    $region2: #{tpu_custom_call.1} parent=1 // pred_check
      _
    $region3: #{tpu_custom_call.1} parent=1 // pred_check_branch
      %11 = sbr.rel (0) target = $region5
    $region4: #{tpu_custom_call.1} parent=1 // pred_region
      %s13 = ssub.s32 256, 256
      %14 = vsyncadd [#allocation3], %s13
      %s15 = sshll.u32 [#allocation2], 4
      %s16 = int_to_ptr.vmem [resolvable:$true] %s15
      %21 = dma.hbm_to_vmem [thread:$0]  %s0, 256, %s16, [#allocation3], 128, 128, 8
    $region5: #{tpu_custom_call.1} parent=1 // pred_fallthru
      _
    // Predicated region
    $region6: #{tpu_custom_call.1} parent=1 // pred_check
      _
    $region7: #{tpu_custom_call.1} parent=1 // pred_check_branch
      %23 = sbr.rel (0) target = $region9
    $region8: #{tpu_custom_call.1} parent=1 // pred_region
      _
    $region9: #{tpu_custom_call.1} parent=1 // pred_fallthru
      _
    // Predicated region
    $region10: #{tpu_custom_call.1} parent=1 // pred_check
      _
    $region11: #{tpu_custom_call.1} parent=1 // pred_check_branch
      %25 = sbr.rel (0) target = $region13
    $region12: #{tpu_custom_call.1} parent=1 // pred_region
      _
    $region13: #{tpu_custom_call.1} parent=1 // pred_fallthru
      _
    // Predicated region
    $region14: #{tpu_custom_call.1} parent=1 // pred_check
      _
    $region15: #{tpu_custom_call.1} parent=1 // pred_check_branch
      %27 = sbr.rel (0) target = $region17
    $region16: #{tpu_custom_call.1} parent=1 // pred_region
      %28 = dma.done [#allocation3], 256
    $region17: #{tpu_custom_call.1} parent=1 // pred_fallthru
      _
    %v29 = vld [vmem:[#allocation2] sm:$0xff]
    %v30 = vld [vmem:[#allocation2 + $0x8] sm:$0xff]
    %v31 = vld [vmem:[%s2] sm:$0xff]
    %v32 = vld [vmem:[%s1] sm:$0x3]
    %v33 = vlaneseq
    %v34 = vand.u32 %v33, 127
    %35 = vset.pattern.permute.xlu0 0
    %36 = vperm.xlu0 %35, %v32
    %v37 = vpop.permute.xlu0 %36
    %vm38 = vcmp.lt.s32.totalorder %v34, %v37
    %v39 = vsel %vm38, 1, 0
    %v40 = vcvt.s32.f32 %v39
    %v41 = vmul.f32 %v29, %v31
    %v42 = vmul.f32 %v30, %v31
    %v43 = vlaneseq
    %v44 = vshrl.u32 %v43, 7
    %v45 = vsub.s32 0, %v44
    %v46 = vrot.slane %v40, %v45
    %48 = vbcast.lane.b32.xlu0 %v46, 256
    %v49 = vpop.permute.xlu0 %48
    %v50 = vlaneseq
    %v51 = vshrl.u32 %v50, 7
    %v52 = vsub.s32 1, %v51
    %v53 = vrot.slane %v40, %v52
    %55 = vbcast.lane.b32.xlu0 %v53, 256
    %v56 = vpop.permute.xlu0 %55
    %v57 = vmul.f32 %v41, %v49
    %v58 = vmul.f32 %v42, %v56
    %vm59 = vcmask 261120
    %v60 = vsel %vm59, %v57, 0.0
    %v61 = vrot.slane %v60, 4
    %v62 = vadd.f32 %v60, %v61
    %v63 = vrot.slane %v62, 2
    %v64 = vadd.f32 %v62, %v63
    %v65 = vrot.slane %v64, 1
    %v66 = vadd.f32 %v64, %v65
    %v67 = vsel %vm59, %v58, 0.0
    %v68 = vrot.slane %v67, 4
    %v69 = vadd.f32 %v67, %v68
    %v70 = vrot.slane %v69, 2
    %v71 = vadd.f32 %v69, %v70
    %v72 = vrot.slane %v71, 1
    %v73 = vadd.f32 %v71, %v72
    %vm76 = vcmask 1041409
    %v77 = vsel %vm76, %v73, %v66
    %vm79 = vcmask 254976
    %80 = vst.msk [vmem:[#allocation5] sm:$0x3] %vm79, %v77
    // Predicated region
    $region18: #{tpu_custom_call.1} parent=1 // pred_check
      _
    $region19: #{tpu_custom_call.1} parent=1 // pred_check_branch
      %82 = sbr.rel (0) target = $region21
    $region20: #{tpu_custom_call.1} parent=1 // pred_region
      %s84 = ssub.s32 32, 32
      %85 = vsyncadd [#allocation4], %s84
      %s87 = sshll.u32 [#allocation5], 4
      %s88 = int_to_ptr.vmem [resolvable:$true] %s87
      %90 = dma.vmem_to_hbm [thread:$0]  %s88, 32, %s3, [#allocation4]
    $region21: #{tpu_custom_call.1} parent=1 // pred_fallthru
      _
    // Predicated region
    $region22: #{tpu_custom_call.1} parent=1 // pred_check
      _
    $region23: #{tpu_custom_call.1} parent=1 // pred_check_branch
      %92 = sbr.rel (0) target = $region25
    $region24: #{tpu_custom_call.1} parent=1 // pred_region
      %93 = dma.done [#allocation4], 32
    $region25: #{tpu_custom_call.1} parent=1 // pred_fallthru
      _
    %94 = vsyncpa [#allocation3], 1
    %95 = vsyncpa [#allocation4], 1

</llo_original>
